<compile_context>
chip_gen: v7x
topology: tpu7x:2x2x1
jax: 0.10.0
libtpu: 0.0.40
codegen_flags: <defaults>
</compile_context>

<pallas_src>
import jax
import jax.numpy as jnp
from jax import lax
from jax.experimental import pallas as pl
from jax.experimental.pallas import tpu as pltpu

_VMEM_LIMIT = 48 * 1024 * 1024  # explicit scoped-VMEM budget (fits v5e/v6e/v7x)


def _round_up(a, m):
    return (a + m - 1) // m * m


# ----------------------------------------------------------------------------
# In-kernel exact GELU (erf via Abramowitz & Stegun 7.1.26, |err| <= 1.5e-7),
# built only from ops guaranteed to lower in Mosaic (abs / exp / select).
# TODO(synk): replace with lax.erf once its Mosaic lowering is guaranteed.
# ----------------------------------------------------------------------------
def _erf(x):
    a1, a2, a3, a4, a5 = 0.254829592, -0.284496736, 1.421413741, -1.453152027, 1.061405429
    p = 0.3275911
    ax = jnp.abs(x)
    t = 1.0 / (1.0 + p * ax)
    poly = ((((a5 * t + a4) * t + a3) * t + a2) * t + a1) * t
    y = 1.0 - poly * jnp.exp(-ax * ax)
    return jnp.where(x >= 0, y, -y)


def _gelu(x):
    return 0.5 * x * (1.0 + _erf(x * 0.7071067811865476))


# ----------------------------------------------------------------------------
# Tiled linear: Y = act(X @ W + b) [+ residual], bf16 MXU operands, f32 accum.
# ----------------------------------------------------------------------------
def pallas_linear(x, w, b, *, activation=None, residual=None, out_dtype=jnp.float32,
                  tm_cap=256, tn_cap=256, tk_cap=512):
    m, k = x.shape
    n = w.shape[1]

    wb = w.astype(jnp.bfloat16)                 # no-op (weights stored in bf16)
    tm = min(_round_up(m, 16), tm_cap)
    tn = min(_round_up(n, 128), tn_cap)
    tk = min(_round_up(k, 128), tk_cap)
    mp, np_, kp = _round_up(m, tm), _round_up(n, tn), _round_up(k, tk)

    xp = jnp.pad(x, ((0, mp - m), (0, kp - k)))            # keep input dtype, cast in-kernel
    wp = jnp.pad(wb, ((0, kp - k), (0, np_ - n)))
    bp = jnp.pad(b.astype(jnp.float32), (0, np_ - n)).reshape(1, np_)

    have_res = residual is not None
    if have_res:
        rp = jnp.pad(residual.astype(jnp.float32), ((0, mp - m), (0, np_ - n)))

    def kernel(*refs):
        if have_res:
            x_ref, w_ref, b_ref, r_ref, o_ref, acc_ref = refs
        else:
            x_ref, w_ref, b_ref, o_ref, acc_ref = refs
            r_ref = None

        @pl.when(pl.program_id(2) == 0)
        def _():
            acc_ref[...] = jnp.zeros_like(acc_ref)

        acc_ref[...] += jnp.dot(x_ref[...].astype(jnp.bfloat16), w_ref[...],
                                preferred_element_type=jnp.float32)

        @pl.when(pl.program_id(2) == pl.num_programs(2) - 1)
        def _():
            y = acc_ref[...] + b_ref[...]
            if activation == "gelu":
                y = _gelu(y)
            if r_ref is not None:
                y = y + r_ref[...]
            o_ref[...] = y.astype(o_ref.dtype)

    in_specs = [
        pl.BlockSpec((tm, tk), lambda i, j, kk: (i, kk)),
        pl.BlockSpec((tk, tn), lambda i, j, kk: (kk, j)),
        pl.BlockSpec((1, tn), lambda i, j, kk: (0, j)),
    ]
    args = [xp, wp, bp]
    if have_res:
        in_specs.append(pl.BlockSpec((tm, tn), lambda i, j, kk: (i, j)))
        args.append(rp)

    out = pl.pallas_call(
        kernel,
        grid=(mp // tm, np_ // tn, kp // tk),
        in_specs=in_specs,
        out_specs=pl.BlockSpec((tm, tn), lambda i, j, kk: (i, j)),
        out_shape=jax.ShapeDtypeStruct((mp, np_), out_dtype),
        scratch_shapes=[pltpu.VMEM((tm, tn), jnp.float32)],
        compiler_params=pltpu.CompilerParams(
            dimension_semantics=("parallel", "parallel", "arbitrary"),
            vmem_limit_bytes=_VMEM_LIMIT),
    )(*args)
    return out[:m, :n]


# ----------------------------------------------------------------------------
# Row-tiled LayerNorm (f32 statistics, eps=1e-5, biased variance like torch)
# ----------------------------------------------------------------------------
def pallas_layernorm(x2d, gamma, beta, *, out_dtype=jnp.float32, tm_cap=512):
    m, d = x2d.shape
    tm = min(_round_up(m, 16), tm_cap)
    mp = _round_up(m, tm)
    xp = jnp.pad(x2d, ((0, mp - m), (0, 0)))

    def kernel(x_ref, g_ref, b_ref, o_ref):
        x = x_ref[...].astype(jnp.float32)
        mu = jnp.mean(x, axis=-1, keepdims=True)
        var = jnp.mean(jnp.square(x - mu), axis=-1, keepdims=True)
        y = (x - mu) * lax.rsqrt(var + 1e-5) * g_ref[...] + b_ref[...]
        o_ref[...] = y.astype(o_ref.dtype)

    out = pl.pallas_call(
        kernel,
        grid=(mp // tm,),
        in_specs=[pl.BlockSpec((tm, d), lambda i: (i, 0)),
                  pl.BlockSpec((1, d), lambda i: (0, 0)),
                  pl.BlockSpec((1, d), lambda i: (0, 0))],
        out_specs=pl.BlockSpec((tm, d), lambda i: (i, 0)),
        out_shape=jax.ShapeDtypeStruct((mp, d), out_dtype),
        compiler_params=pltpu.CompilerParams(
            dimension_semantics=("parallel",),
            vmem_limit_bytes=_VMEM_LIMIT),
    )(xp, gamma.reshape(1, d), beta.reshape(1, d))
    return out[:m]


# ----------------------------------------------------------------------------
# PACA attention: one program per batch, all heads inside, fused-qkv input,
# lane-dense (L, dim) output (x rows followed by kernel rows).
# ----------------------------------------------------------------------------
def _make_paca_kernel(num_heads, n1, dim, scale, polar_table, n_ori=8):
    d = dim // num_heads
    scale = float(scale)
    # TODO(synk): polar_emb baked as closure constants (eager only); move to an SMEM
    #             operand if the whole forward gets jitted.
    polar_table = tuple(float(v) for v in polar_table)

    def dot_nt(a, bmat):  # (M, d) x (N, d) -> (M, N), contract the last dims
        return lax.dot_general(a, bmat, (((1,), (1,)), ((), ())),
                               preferred_element_type=jnp.float32)

    def kernel(qkv_ref, rd_ref, polar_ref, mkn_ref, mnk_ref, out_ref):
        qkv = qkv_ref[0]                 # (L, 3*dim) bf16   rows [0,n1)=x, [n1,L)=kernel
        rd = rd_ref[0]                   # (H, K, N1) f32    dis_embed bias
        polar = polar_ref[0]             # (K, N1) int32 in [0, 7]
        mkn = mkn_ref[0] > 0.5           # (K, N1) bool, True => masked
        mnk = mnk_ref[0] > 0.5           # (N1, K) bool, True => masked

        nk = polar.shape[0]

        # one-hot orientation masks are head-independent: build once, reuse per head
        pmask = [(polar == o).astype(jnp.float32) for o in range(n_ori)]

        x_parts = []
        k_parts = []
        for h in range(num_heads):
            c0 = h * d
            q_h = qkv[:n1, c0:c0 + d]
            k_h = qkv[:n1, dim + c0:dim + c0 + d]
            v_h = qkv[:n1, 2 * dim + c0:2 * dim + c0 + d]
            kq_h = qkv[n1:, c0:c0 + d]
            kk_h = qkv[n1:, dim + c0:dim + c0 + d]
            kv_h = qkv[n1:, 2 * dim + c0:2 * dim + c0 + d]

            # kernel-query vs token-key scores (pre-mask, used for main orientation)
            kx = dot_nt(kq_h, k_h) * scale                 # (K, N1) f32

            # ---- generate_main_orientation: argmax_o sum_n |kx| * onehot(polar)[o] ----
            a_abs = jnp.abs(kx)
            best_val = jnp.full((nk, 1), -jnp.inf, dtype=jnp.float32)
            best_idx = jnp.zeros((nk, 1), dtype=jnp.int32)
            for o in range(n_ori):
                s = jnp.sum(a_abs * pmask[o], axis=-1, keepdims=True)
                take = s > best_val
                best_idx = jnp.where(take, o, best_idx)
                best_val = jnp.where(take, s, best_val)
            new_polar = polar - best_idx
            new_polar = jnp.where(new_polar < 0, new_polar + n_ori, new_polar)

            # polar_emb lookup (8-entry table)
            pe = jnp.zeros_like(kx)
            for o in range(n_ori):
                pe = pe + (new_polar == o).astype(jnp.float32) * polar_table[o]

            bias = rd[h] + pe                              # (K, N1) f32

            # ---- kernel tokens attend over x tokens (masked_fill -1e6, like torch) ----
            lk = jnp.where(mkn, -1e6, kx) + bias
            lk = lk - jnp.max(lk, axis=-1, keepdims=True)
            pk = jnp.exp(lk)
            pk = pk / jnp.sum(pk, axis=-1, keepdims=True)
            k_parts.append(jnp.dot(pk.astype(jnp.bfloat16), v_h,
                                   preferred_element_type=jnp.float32))   # (K, d)

            # ---- x tokens attend over kernel tokens (masked_fill -1e9, like torch) ----
            xk = dot_nt(q_h, kk_h) * scale                 # (N1, K)
            lx = jnp.where(mnk, -1e9, xk) + bias.T
            lx = lx - jnp.max(lx, axis=-1, keepdims=True)
            px = jnp.exp(lx)
            px = px / jnp.sum(px, axis=-1, keepdims=True)
            x_parts.append(jnp.dot(px.astype(jnp.bfloat16), kv_h,
                                   preferred_element_type=jnp.float32))   # (N1, d)

        # lane-dense merged-head outputs, single store per token group
        x_all = jnp.concatenate(x_parts, axis=-1)          # (N1, dim)
        k_all = jnp.concatenate(k_parts, axis=-1)          # (K, dim)
        out_ref[0, :n1, :] = x_all.astype(out_ref.dtype)
        out_ref[0, n1:, :] = k_all.astype(out_ref.dtype)

    return kernel


def paca_attention(qkv, rd_bias, polar, mask_kn, mask_nk, polar_table, num_heads, n1):
    """qkv: (B, L, 3*dim) bf16 with rows [0,n1)=x tokens, [n1,L)=kernel tokens."""
    b, L, three_dim = qkv.shape
    dim = three_dim // 3
    nk = L - n1
    d = dim // num_heads
    scale = d ** (-0.5)
    # TODO(synk): for very long sequences the (L, 3*dim) block should be tiled over N1.
    kernel = _make_paca_kernel(num_heads, n1, dim, scale, polar_table)
    return pl.pallas_call(
        kernel,
        grid=(b,),
        in_specs=[
            pl.BlockSpec((1, L, 3 * dim), lambda i: (i, 0, 0)),
            pl.BlockSpec((1, num_heads, nk, n1), lambda i: (i, 0, 0, 0)),
            pl.BlockSpec((1, nk, n1), lambda i: (i, 0, 0)),
            pl.BlockSpec((1, nk, n1), lambda i: (i, 0, 0)),
            pl.BlockSpec((1, n1, nk), lambda i: (i, 0, 0)),
        ],
        out_specs=pl.BlockSpec((1, L, dim), lambda i: (i, 0, 0)),
        out_shape=jax.ShapeDtypeStruct((b, L, dim), jnp.bfloat16),
        compiler_params=pltpu.CompilerParams(
            dimension_semantics=("parallel",),
            vmem_limit_bytes=_VMEM_LIMIT),
    )(qkv, rd_bias, polar, mask_kn, mask_nk)


# ----------------------------------------------------------------------------
# Block / model forward
# ----------------------------------------------------------------------------
def block_forward(blk, tokens, rd_idx, polar, mask_kn, mask_nk, num_heads, n1):
    b, L, dim = tokens.shape

    # norm1 on x-tokens and kernel-tokens together (shared weights).  NOTE: the
    # reference rebinds x = norm1(x), so xn is also the residual base.
    xn = pallas_layernorm(tokens.reshape(b * L, dim), blk["norm1_g"], blk["norm1_b"])
    qkv = pallas_linear(xn, blk["qkv_w"], blk["qkv_b"],
                        out_dtype=jnp.bfloat16).reshape(b, L, 3 * dim)

    # dis_embed gather for this block.
    # TODO(synk): gather + layout transpose kept in XLA glue (in-kernel one-hot lookup
    #             would need awkward relayouts at these head counts).
    rd_bias = jnp.transpose(blk["dis_embed"][rd_idx], (0, 3, 1, 2)).astype(jnp.float32)

    attn = paca_attention(qkv, rd_bias, polar, mask_kn, mask_nk,
                          blk["polar_emb"][:, 0], num_heads, n1)       # (b, L, dim) bf16

    # projection with the attention residual fused into the epilogue
    x1 = pallas_linear(attn.reshape(b * L, dim), blk["proj_w"], blk["proj_b"],
                       residual=xn)                                     # (b*L, dim) f32

    # MLP: norm2 -> fc1 (+ fused exact GELU) -> fc2 (+ fused residual)
    xm = pallas_layernorm(x1, blk["norm2_g"], blk["norm2_b"], out_dtype=jnp.bfloat16)
    hid = pallas_linear(xm, blk["fc1_w"], blk["fc1_b"], activation="gelu",
                        out_dtype=jnp.bfloat16)
    x2 = pallas_linear(hid, blk["fc2_w"], blk["fc2_b"], residual=x1)
    return x2.reshape(b, L, dim)


def pama_vit_forward(params, imgs, wsi_rd, wsi_polar, token_mask, kernel_mask,
                     num_heads, num_kernel):
    b, n, c = imgs.shape
    dim = params["patch_w"].shape[1]
    n1 = n + 1
    nk = num_kernel
    L = n1 + nk

    x = pallas_linear(imgs.reshape(b * n, c), params["patch_w"], params["patch_b"])
    x = x.reshape(b, n, dim)

    # index prep (mean truncated toward zero, matching torch .mean().long())
    rd_mean = jnp.mean(wsi_rd.astype(jnp.float32), axis=-1).astype(jnp.int32)
    rd_idx = jnp.concatenate([rd_mean[..., None], wsi_rd.astype(jnp.int32)], axis=-1)
    polar_mean = jnp.mean(wsi_polar.astype(jnp.float32), axis=-1).astype(jnp.int32)
    polar_idx = jnp.concatenate([polar_mean[..., None], wsi_polar.astype(jnp.int32)], axis=-1)
    polar = jnp.clip(polar_idx, 0, 7).astype(jnp.int32)                  # (b, nk, n1)

    # attention mask in both layouts (computed once, shared by every block)
    att = jnp.einsum("bid,bjd->bij", token_mask.astype(jnp.float32),
                     kernel_mask.astype(jnp.float32))                    # (b, n, nk)
    att = jnp.concatenate([jnp.ones((b, 1, nk), jnp.float32), att], axis=1)
    mask_nk = (att < 0.5).astype(jnp.float32)                            # (b, n1, nk)
    mask_kn = jnp.transpose(mask_nk, (0, 2, 1))                          # (b, nk, n1)

    cls = jnp.broadcast_to(params["cls_token"], (b, 1, dim)).astype(jnp.float32)
    ktok = jnp.broadcast_to(params["kernel_token"], (b, nk, dim)).astype(jnp.float32)
    tokens = jnp.concatenate([cls, x, ktok], axis=1)                     # (b, L, dim)

    for blk in params["blocks"]:
        tokens = block_forward(blk, tokens, rd_idx, polar, mask_kn, mask_nk,
                               num_heads, n1)

    normed = pallas_layernorm(tokens.reshape(b * L, dim),
                              params["norm_g"], params["norm_b"]).reshape(b, L, dim)
    kernel_tokens = normed[:, n1:]                                       # (b, nk, dim)
    outcome = normed[:, 0]                                               # cls token
    logits = pallas_linear(outcome, params["head_w"], params["head_b"])
    return logits, kernel_tokens


# ----------------------------------------------------------------------------
# Deterministic parameter init (torch shapes; matmul weights stored in bf16)
# ----------------------------------------------------------------------------
def init_params(key, *, in_chans, embed_dim, depth, num_heads, mlp_ratio, num_classes):
    hidden = int(embed_dim * mlp_ratio)
    keys = iter(jax.random.split(key, 8 + depth * 8))

    def xavier(k, fan_in, fan_out):
        lim = (6.0 / (fan_in + fan_out)) ** 0.5
        w = jax.random.uniform(k, (fan_in, fan_out), jnp.float32, -lim, lim)
        return w.astype(jnp.bfloat16)       # bf16 weights: native MXU operand format

    params = {
        "patch_w": xavier(next(keys), in_chans, embed_dim),
        "patch_b": jnp.zeros((embed_dim,), jnp.float32),
        "cls_token": 0.02 * jax.random.normal(next(keys), (1, 1, embed_dim), jnp.float32),
        "kernel_token": 0.02 * jax.random.normal(next(keys), (1, 1, embed_dim), jnp.float32),
        "norm_g": jnp.ones((embed_dim,), jnp.float32),
        "norm_b": jnp.zeros((embed_dim,), jnp.float32),
        "head_w": xavier(next(keys), embed_dim, num_classes),
        "head_b": jnp.zeros((num_classes,), jnp.float32),
        "blocks": [],
    }
    for _ in range(depth):
        blk = {
            "norm1_g": jnp.ones((embed_dim,), jnp.float32),
            "norm1_b": jnp.zeros((embed_dim,), jnp.float32),
            "norm2_g": jnp.ones((embed_dim,), jnp.float32),
            "norm2_b": jnp.zeros((embed_dim,), jnp.float32),
            "qkv_w": xavier(next(keys), embed_dim, 3 * embed_dim),
            "qkv_b": jnp.zeros((3 * embed_dim,), jnp.float32),
            "proj_w": xavier(next(keys), embed_dim, embed_dim),
            "proj_b": jnp.zeros((embed_dim,), jnp.float32),
            "polar_emb": jax.random.normal(next(keys), (8, 1), jnp.float32),
            "dis_embed": jax.random.normal(next(keys), (64 + 2, num_heads), jnp.float32),
            "fc1_w": xavier(next(keys), embed_dim, hidden),
            "fc1_b": jnp.zeros((hidden,), jnp.float32),
            "fc2_w": xavier(next(keys), hidden, embed_dim),
            "fc2_b": jnp.zeros((embed_dim,), jnp.float32),
        }
        params["blocks"].append(blk)
    return params


# ----------------------------------------------------------------------------
# Main: small synthetic config
# ----------------------------------------------------------------------------
if __name__ == "__main__":
    B, N, IN_CHANS = 2, 15, 32         # N+1 = 16 x-tokens after cls
    EMBED_DIM, NUM_HEADS = 64, 4       # head_dim = 16
    NUM_KERNEL, DEPTH = 8, 2
    MLP_RATIO, NUM_CLASSES = 4.0, 5

    root = jax.random.PRNGKey(0)
    k_param, k_img, k_rd, k_pol, k_tm, k_km = jax.random.split(root, 6)

    params = init_params(
        k_param, in_chans=IN_CHANS, embed_dim=EMBED_DIM, depth=DEPTH,
        num_heads=NUM_HEADS, mlp_ratio=MLP_RATIO, num_classes=NUM_CLASSES,
    )

    imgs = jax.random.normal(k_img, (B, N, IN_CHANS), jnp.float32)
    wsi_rd = jax.random.randint(k_rd, (B, NUM_KERNEL, N), 0, 64)      # [0, 63]
    wsi_polar = jax.random.randint(k_pol, (B, NUM_KERNEL, N), 0, 8)   # [0, 7]
    token_mask = (jax.random.uniform(k_tm, (B, N, 1)) > 0.2).astype(jnp.float32)
    kernel_mask = (jax.random.uniform(k_km, (B, NUM_KERNEL, 1)) > 0.2).astype(jnp.float32)

    logits, kernel_tokens = pama_vit_forward(
        params, imgs, wsi_rd, wsi_polar, token_mask, kernel_mask,
        num_heads=NUM_HEADS, num_kernel=NUM_KERNEL,
    )
    logits = jax.block_until_ready(logits)
    kernel_tokens = jax.block_until_ready(kernel_tokens)

    assert logits.shape == (B, NUM_CLASSES)
    assert kernel_tokens.shape == (B, NUM_KERNEL, EMBED_DIM)
    assert bool(jnp.all(jnp.isfinite(logits))) and bool(jnp.all(jnp.isfinite(kernel_tokens)))
    print("KERNEL_OK")
</pallas_src>

<mosaic_0001>
module attributes {stable_mosaic.version = 11 : i64} {
  func.func @kernel(%arg0: i32, %arg1: i32, %arg2: i32, %arg3: memref<32x128xf32, #tpu.memory_space<vmem>>, %arg4: memref<128x128xbf16, #tpu.memory_space<vmem>>, %arg5: memref<1x128xf32, #tpu.memory_space<vmem>>, %arg6: memref<32x128xf32, #tpu.memory_space<vmem>>, %arg7: memref<32x128xf32, #tpu.memory_space<vmem>>) attributes {dimension_semantics = [#tpu.dimension_semantics<parallel>, #tpu.dimension_semantics<parallel>, #tpu.dimension_semantics<arbitrary>], iteration_bounds = array<i64: 1, 1, 1>, scalar_prefetch = 0 : i64, scratch_operands = 1 : i64, tpu.core_type = #tpu.core_type<tc>, window_params = [{transform_indices = @transform_0, window_bounds = array<i64: 32, 128>}, {transform_indices = @transform_1, window_bounds = array<i64: 128, 128>}, {transform_indices = @transform_2, window_bounds = array<i64: 1, 128>}, {transform_indices = @transform_3, window_bounds = array<i64: 32, 128>}]} {
    %c0_i32 = arith.constant 0 : i32
    %0 = arith.cmpi eq, %arg2, %c0_i32 : i32
    %1 = arith.extui %0 : i1 to i32
    %c0_i32_0 = arith.constant 0 : i32
    %2 = arith.cmpi ne, %1, %c0_i32_0 : i32
    scf.if %2 {
      %cst_10 = arith.constant 0.000000e+00 : f32
      %13 = vector.broadcast %cst_10 : f32 to vector<32x128xf32>
      %c0_11 = arith.constant 0 : index
      %c0_12 = arith.constant 0 : index
      %14 = vector.load %arg7[%c0_11, %c0_12] : memref<32x128xf32, #tpu.memory_space<vmem>>, vector<32x128xf32>
      tpu.vector_store %arg7[%c0_11, %c0_12], %13 {strides = array<i32>} : memref<32x128xf32, #tpu.memory_space<vmem>>, vector<32x128xf32>,
    } else {
    }
    %c0 = arith.constant 0 : index
    %c0_1 = arith.constant 0 : index
    %3 = vector.load %arg7[%c0, %c0_1] : memref<32x128xf32, #tpu.memory_space<vmem>>, vector<32x128xf32>
    %c0_2 = arith.constant 0 : index
    %c0_3 = arith.constant 0 : index
    %4 = vector.load %arg3[%c0_2, %c0_3] : memref<32x128xf32, #tpu.memory_space<vmem>>, vector<32x128xf32>
    %5 = arith.truncf %4 : vector<32x128xf32> to vector<32x128xbf16>
    %c0_4 = arith.constant 0 : index
    %c0_5 = arith.constant 0 : index
    %6 = vector.load %arg4[%c0_4, %c0_5] : memref<128x128xbf16, #tpu.memory_space<vmem>>, vector<128x128xbf16>
    %cst = arith.constant dense<0.000000e+00> : vector<32x128xf32>
    %7 = tpu.matmul %5, %6, %cst {dimension_numbers = #tpu.dot_dimension_numbers<[1], [0], [0], [1], [0, 0, 1, 1], [], []>} : vector<32x128xbf16>, vector<128x128xbf16>, vector<32x128xf32> -> vector<32x128xf32>
    %8 = arith.addf %3, %7 : vector<32x128xf32>
    %c0_6 = arith.constant 0 : index
    %c0_7 = arith.constant 0 : index
    %9 = vector.load %arg7[%c0_6, %c0_7] : memref<32x128xf32, #tpu.memory_space<vmem>>, vector<32x128xf32>
    tpu.vector_store %arg7[%c0_6, %c0_7], %8 {strides = array<i32>} : memref<32x128xf32, #tpu.memory_space<vmem>>, vector<32x128xf32>,
    %c0_i32_8 = arith.constant 0 : i32
    %10 = arith.cmpi eq, %arg2, %c0_i32_8 : i32
    %11 = arith.extui %10 : i1 to i32
    %c0_i32_9 = arith.constant 0 : i32
    %12 = arith.cmpi ne, %11, %c0_i32_9 : i32
    scf.if %12 {
      %c0_10 = arith.constant 0 : index
      %c0_11 = arith.constant 0 : index
      %13 = vector.load %arg7[%c0_10, %c0_11] : memref<32x128xf32, #tpu.memory_space<vmem>>, vector<32x128xf32>
      %c0_12 = arith.constant 0 : index
      %c0_13 = arith.constant 0 : index
      %14 = vector.load %arg5[%c0_12, %c0_13] : memref<1x128xf32, #tpu.memory_space<vmem>>, vector<1x128xf32>
      %15 = vector.broadcast %14 : vector<1x128xf32> to vector<32x128xf32>
      %16 = arith.addf %13, %15 : vector<32x128xf32>
      %c0_14 = arith.constant 0 : index
      %c0_15 = arith.constant 0 : index
      %17 = vector.load %arg6[%c0_14, %c0_15] : memref<32x128xf32, #tpu.memory_space<vmem>>, vector<32x128xf32>
      tpu.vector_store %arg6[%c0_14, %c0_15], %16 {strides = array<i32>} : memref<32x128xf32, #tpu.memory_space<vmem>>, vector<32x128xf32>,
    } else {
    }
    return
  }
  func.func @transform_0(%arg0: i32, %arg1: i32, %arg2: i32) -> (i32, i32) {
    %c0_i32 = arith.constant 0 : i32
    return %arg0, %arg2 : i32, i32
  }
  func.func @transform_1(%arg0: i32, %arg1: i32, %arg2: i32) -> (i32, i32) {
    %c0_i32 = arith.constant 0 : i32
    return %arg2, %arg1 : i32, i32
  }
  func.func @transform_2(%arg0: i32, %arg1: i32, %arg2: i32) -> (i32, i32) {
    %c0_i32 = arith.constant 0 : i32
    %c0_i32_0 = arith.constant 0 : i32
    return %c0_i32, %arg1 : i32, i32
  }
  func.func @transform_3(%arg0: i32, %arg1: i32, %arg2: i32) -> (i32, i32) {
    %c0_i32 = arith.constant 0 : i32
    return %arg0, %arg1 : i32, i32
  }
}

</mosaic_0001>

<llo_original>
// kernel: tpu_custom_call.1
$region0: #{tpu_custom_call.1}
  #allocation0 [shape = 'u32[]', space=smem, size = 0x4, offset = 0x4, fixed_abs, tag = 'smem constant byte address 0x4 - core index']
  #allocation1 [shape = 'u32[144,128]{1,0:T(1,128)}', space=vmem, size = 0x12000, scoped, tag = 'internal scratch']
  #allocation2 [shape = 'f32[32,128]{1,0:T(8,128)}', space=vmem, size = 0x4000, scoped, tag = 'scratch operand']
  %s0 = inlined_call_operand.hbm [shape: f32[32,128], index: 0, kind: input, shape index: {}]
  %s1 = inlined_call_operand.hbm [shape: bf16[128,128], index: 1, kind: input, shape index: {}]
  %s2 = inlined_call_operand.vmem [shape: f32[1,128], index: 2, kind: input, shape index: {}]
  %s3 = inlined_call_operand.hbm [shape: f32[32,128], index: 3, kind: output, shape index: {}]
  %s4 = sld [smem:[#allocation0]]
  $region38: #{tpu_custom_call.1} parent=0
    _
  %s6 = ssub.s32 1, %s4
  %s7 = scalar_select 0, %s6, %s4
  $region1: #{tpu_custom_call.1} parent=0
    #allocation3 [shape = 'u8[16384]{0}', space=vmem, size = 0x4000, scoped, tag = 'input window, operand 0, single buffered']
    #allocation4 [shape = 's32[1]{0}', space=sflag, size = 0x4, scoped, tag = 'scoped memory for tpu_custom_call.1']
    #allocation5 [shape = 's32[1]{0}', space=sflag, size = 0x4, scoped, tag = 'scoped memory for tpu_custom_call.1']
    #allocation6 [shape = 'u8[32768]{0}', space=vmem, size = 0x8000, scoped, tag = 'input window, operand 1, single buffered']
    #allocation7 [shape = 's32[1]{0}', space=sflag, size = 0x4, scoped, tag = 'scoped memory for tpu_custom_call.1']
    #allocation8 [shape = 'u8[16384]{0}', space=vmem, size = 0x4000, scoped, tag = 'output window, operand 0, single buffered']
    %8 = vsyncpa [#allocation4], 0
    %9 = vsyncpa [#allocation7], 0
    %10 = vsyncpa [#allocation5], 0
    // Predicated region
    $region2: #{tpu_custom_call.1} parent=1 // pred_check
      _
    $region3: #{tpu_custom_call.1} parent=1 // pred_check_branch
      %12 = sbr.rel (0) target = $region5
    $region4: #{tpu_custom_call.1} parent=1 // pred_region
      %s14 = ssub.s32 512, 512
      %15 = vsyncadd [#allocation4], %s14
      %s16 = sshll.u32 [#allocation3], 4
      %s17 = int_to_ptr.vmem [resolvable:$true] %s16
      %22 = dma.hbm_to_vmem [thread:$0]  %s0, 512, %s17, [#allocation4], 128, 128, 8
    $region5: #{tpu_custom_call.1} parent=1 // pred_fallthru
      _
    // Predicated region
    $region6: #{tpu_custom_call.1} parent=1 // pred_check
      _
    $region7: #{tpu_custom_call.1} parent=1 // pred_check_branch
      %24 = sbr.rel (0) target = $region9
    $region8: #{tpu_custom_call.1} parent=1 // pred_region
      %s26 = ssub.s32 1024, 1024
      %27 = vsyncadd [#allocation7], %s26
      %s28 = sshll.u32 [#allocation6], 4
      %s29 = int_to_ptr.vmem [resolvable:$true] %s28
      %34 = dma.hbm_to_vmem [thread:$0]  %s1, 1024, %s29, [#allocation7], 64, 64, 4
    $region9: #{tpu_custom_call.1} parent=1 // pred_fallthru
      _
    // Predicated region
    $region10: #{tpu_custom_call.1} parent=1 // pred_check
      _
    $region11: #{tpu_custom_call.1} parent=1 // pred_check_branch
      %36 = sbr.rel (0) target = $region13
    $region12: #{tpu_custom_call.1} parent=1 // pred_region
      _
    $region13: #{tpu_custom_call.1} parent=1 // pred_fallthru
      _
    // Predicated region
    $region14: #{tpu_custom_call.1} parent=1 // pred_check
      _
    $region15: #{tpu_custom_call.1} parent=1 // pred_check_branch
      %38 = sbr.rel (0) target = $region17
    $region16: #{tpu_custom_call.1} parent=1 // pred_region
      %39 = dma.done [#allocation4], 512
    $region17: #{tpu_custom_call.1} parent=1 // pred_fallthru
      _
    // Predicated region
    $region18: #{tpu_custom_call.1} parent=1 // pred_check
      _
    $region19: #{tpu_custom_call.1} parent=1 // pred_check_branch
      %41 = sbr.rel (0) target = $region21
    $region20: #{tpu_custom_call.1} parent=1 // pred_region
      %42 = dma.done [#allocation7], 1024
    $region21: #{tpu_custom_call.1} parent=1 // pred_fallthru
      _
    %p44 = scmp.eq.s32.totalorder 0, 0
    // Predicated region
    $region22: #{tpu_custom_call.1} parent=1 // pred_check
      %p45 = pneg %p44
    $region23: #{tpu_custom_call.1} parent=1 // pred_check_branch
      %47 = sbr.rel (%p45) target = $region25
    $region24: #{tpu_custom_call.1} parent=1 // pred_region
      %48 = vst [vmem:[#allocation2] sm:$0xff] 0.0
      %49 = vst [vmem:[#allocation2 + $0x8] sm:$0xff] 0.0
      %50 = vst [vmem:[#allocation2 + $0x10] sm:$0xff] 0.0
      %51 = vst [vmem:[#allocation2 + $0x18] sm:$0xff] 0.0
    $region25: #{tpu_custom_call.1} parent=1 // pred_fallthru
      _
    %v52 = vld [vmem:[#allocation2] sm:$0xff]
    %v53 = vld [vmem:[#allocation2 + $0x8] sm:$0xff]
    %v54 = vld [vmem:[#allocation2 + $0x10] sm:$0xff]
    %v55 = vld [vmem:[#allocation2 + $0x18] sm:$0xff]
    %v56 = vld [vmem:[#allocation3] sm:$0xff]
    %v57 = vld [vmem:[#allocation3 + $0x8] sm:$0xff]
    %v58 = vld [vmem:[#allocation3 + $0x10] sm:$0xff]
    %v59 = vld [vmem:[#allocation3 + $0x18] sm:$0xff]
    %v60 = vpack.c.bf16 %v57, %v56
    %v61 = vpack.c.bf16 %v59, %v58
    %v62 = vld [vmem:[#allocation6] sm:$0xf]
    %v63 = vld [vmem:[#allocation6 + $0x4] sm:$0xf]
    %v64 = vld [vmem:[#allocation6 + $0x8] sm:$0xf]
    %v65 = vld [vmem:[#allocation6 + $0xc] sm:$0xf]
    %v66 = vld [vmem:[#allocation6 + $0x10] sm:$0xf]
    %v67 = vld [vmem:[#allocation6 + $0x14] sm:$0xf]
    %v68 = vld [vmem:[#allocation6 + $0x18] sm:$0xf]
    %v69 = vld [vmem:[#allocation6 + $0x1c] sm:$0xf]
    %v70 = vld [vmem:[#allocation6 + $0x20] sm:$0xf]
    %v71 = vld [vmem:[#allocation6 + $0x24] sm:$0xf]
    %v72 = vld [vmem:[#allocation6 + $0x28] sm:$0xf]
    %v73 = vld [vmem:[#allocation6 + $0x2c] sm:$0xf]
    %v74 = vld [vmem:[#allocation6 + $0x30] sm:$0xf]
    %v75 = vld [vmem:[#allocation6 + $0x34] sm:$0xf]
    %v76 = vld [vmem:[#allocation6 + $0x38] sm:$0xf]
    %v77 = vld [vmem:[#allocation6 + $0x3c] sm:$0xf]
    %v94 = vunpack.c.l.b16 %v62
    %v95 = vunpack.c.l.b16 %v63
    %v96 = vunpack.c.l.b16 %v64
    %v97 = vunpack.c.l.b16 %v65
    %v98 = vunpack.c.l.b16 %v66
    %v99 = vunpack.c.l.b16 %v67
    %v100 = vunpack.c.l.b16 %v68
    %v101 = vunpack.c.l.b16 %v69
    %v102 = vunpack.c.l.b16 %v70
    %v103 = vunpack.c.l.b16 %v71
    %v104 = vunpack.c.l.b16 %v72
    %v105 = vunpack.c.l.b16 %v73
    %v106 = vunpack.c.l.b16 %v74
    %v107 = vunpack.c.l.b16 %v75
    %v108 = vunpack.c.l.b16 %v76
    %v109 = vunpack.c.l.b16 %v77
    %v110 = vpack.c.b16 %v95, %v94
    %v111 = vpack.c.b16 %v97, %v96
    %v112 = vpack.c.b16 %v99, %v98
    %v113 = vpack.c.b16 %v101, %v100
    %v114 = vpack.c.b16 %v103, %v102
    %v115 = vpack.c.b16 %v105, %v104
    %v116 = vpack.c.b16 %v107, %v106
    %v117 = vpack.c.b16 %v109, %v108
    %126 = vmatprep.subr.bf16.mxu0 0
    %127 = vmatpush1.bf16.msra.mxu0 %v110
    %128 = vmatprep.subr.bf16.mxu0 0
    %129 = vmatpush1.bf16.msra.mxu0 %v111
    %130 = vmatprep.subr.bf16.mxu0 0
    %131 = vmatpush1.bf16.msra.mxu0 %v112
    %132 = vmatprep.subr.bf16.mxu0 0
    %133 = vmatpush1.bf16.msra.mxu0 %v113
    %134 = vmatprep.subr.bf16.mxu0 0
    %135 = vmatpush1.bf16.msra.mxu0 %v114
    %136 = vmatprep.subr.bf16.mxu0 0
    %137 = vmatpush1.bf16.msra.mxu0 %v115
    %138 = vmatprep.subr.bf16.mxu0 0
    %139 = vmatpush1.bf16.msra.mxu0 %v116
    %140 = vmatprep.subr.bf16.mxu0 0
    %141 = vmatpush1.bf16.msra.mxu0 %v117
    %142 = vmatprep.subr.bf16.mxu0 0
    %143 = vmatpush1.bf16.msra.mxu0 0
    %144 = vmatprep.subr.bf16.mxu0 0
    %145 = vmatpush1.bf16.msra.mxu0 0
    %146 = vmatprep.subr.bf16.mxu0 0
    %147 = vmatpush1.bf16.msra.mxu0 0
    %148 = vmatprep.subr.bf16.mxu0 0
    %149 = vmatpush1.bf16.msra.mxu0 0
    %150 = vmatprep.subr.bf16.mxu0 0
    %151 = vmatpush1.bf16.msra.mxu0 0
    %152 = vmatprep.subr.bf16.mxu0 0
    %153 = vmatpush1.bf16.msra.mxu0 0
    %154 = vmatprep.subr.bf16.mxu0 0
    %155 = vmatpush1.bf16.msra.mxu0 0
    %156 = vmatprep.subr.bf16.mxu0 0
    %157 = vmatpush1.bf16.msra.mxu0 0
    %158 = vmatprep.mubr.bf16.mxu0 0
    %159 = vmatmul.mubr.bf16.gmra.mrb[0].mxu0 %v60
    %v160 = vpop.f32.mrb[0].mxu0
    %v161 = vadd.f32 0.0, %v160
    %v162 = vpop.f32.mrb[0].mxu0
    %v163 = vpop.f32.mrb[0].mxu0
    %v164 = vadd.f32 0.0, %v163
    %v165 = vpop.f32.mrb[0].mxu0
    %166 = vmatprep.mubr.bf16.mxu0 0
    %167 = vmatmul.mubr.bf16.gmra.mrb[0].mxu0 %v61
    %v168 = vpop.f32.mrb[0].mxu0
    %v169 = vadd.f32 0.0, %v168
    %v170 = vpop.f32.mrb[0].mxu0
    %v171 = vpop.f32.mrb[0].mxu0
    %v172 = vadd.f32 0.0, %v171
    %v173 = vpop.f32.mrb[0].mxu0
    %174 = vdwg.mxu0
    %v175 = vadd.f32 %v52, %v161
    %v176 = vadd.f32 %v53, %v164
    %v177 = vadd.f32 %v54, %v169
    %v178 = vadd.f32 %v55, %v172
    %179 = vst [vmem:[#allocation2] sm:$0xff] %v175
    %180 = vst [vmem:[#allocation2 + $0x8] sm:$0xff] %v176
    %181 = vst [vmem:[#allocation2 + $0x10] sm:$0xff] %v177
    %182 = vst [vmem:[#allocation2 + $0x18] sm:$0xff] %v178
    // Predicated region
    $region26: #{tpu_custom_call.1} parent=1 // pred_check
      %p183 = pneg %p44
    $region27: #{tpu_custom_call.1} parent=1 // pred_check_branch
      %185 = sbr.rel (%p183) target = $region29
    $region28: #{tpu_custom_call.1} parent=1 // pred_region
      %v186 = vld [vmem:[#allocation2] sm:$0xff]
      %v187 = vld [vmem:[#allocation2 + $0x8] sm:$0xff]
      %v188 = vld [vmem:[#allocation2 + $0x10] sm:$0xff]
      %v189 = vld [vmem:[#allocation2 + $0x18] sm:$0xff]
      %v190 = vld [vmem:[%s2] sm:$0x1]
      %v192 = vlaneseq
      %v193 = vshrl.u32 %v192, 7
      %v194 = vsub.s32 0, %v193
      %v195 = vrot.slane %v190, %v194
      %v197 = vadd.f32 %v186, %v195
      %v198 = vadd.f32 %v187, %v195
      %v199 = vadd.f32 %v188, %v195
      %v200 = vadd.f32 %v189, %v195
      %201 = vst [vmem:[#allocation8] sm:$0xff] %v197
      %202 = vst [vmem:[#allocation8 + $0x8] sm:$0xff] %v198
      %203 = vst [vmem:[#allocation8 + $0x10] sm:$0xff] %v199
      %204 = vst [vmem:[#allocation8 + $0x18] sm:$0xff] %v200
    $region29: #{tpu_custom_call.1} parent=1 // pred_fallthru
      _
    // Predicated region
    $region30: #{tpu_custom_call.1} parent=1 // pred_check
      _
    $region31: #{tpu_custom_call.1} parent=1 // pred_check_branch
      %206 = sbr.rel (0) target = $region33
    $region32: #{tpu_custom_call.1} parent=1 // pred_region
      %s208 = ssub.s32 512, 512
      %209 = vsyncadd [#allocation5], %s208
      %s210 = sshll.u32 [#allocation8], 4
      %s211 = int_to_ptr.vmem [resolvable:$true] %s210
      %216 = dma.vmem_to_hbm [thread:$0]  %s211, 512, %s3, [#allocation5], 128, 128, 8
    $region33: #{tpu_custom_call.1} parent=1 // pred_fallthru
      _
    // Predicated region
    $region34: #{tpu_custom_call.1} parent=1 // pred_check
      _
    $region35: #{tpu_custom_call.1} parent=1 // pred_check_branch
      %218 = sbr.rel (0) target = $region37
    $region36: #{tpu_custom_call.1} parent=1 // pred_region
      %219 = dma.done [#allocation5], 512
    $region37: #{tpu_custom_call.1} parent=1 // pred_fallthru
      _
    %220 = vsyncpa [#allocation4], 1
    %221 = vsyncpa [#allocation7], 1
    %222 = vsyncpa [#allocation5], 1

</llo_original>
